<compile_context>
chip_gen: v6e
topology: v6e:2x2x1
jax: 0.10.0
libtpu: 0.0.40
codegen_flags: <defaults>
</compile_context>

<pallas_src>
from functools import partial

import jax
import jax.numpy as jnp
from jax import lax
from jax.experimental import pallas as pl
from jax.experimental.pallas import tpu as pltpu


# --------------------------------------------------------------------------
# Pallas kernels
# --------------------------------------------------------------------------
def _conv_bn_relu_kernel_1k(p_ref, w_ref, b_ref, o_ref):
    # Fast path: the whole K (reduction) dim fits in one tile.
    # p_ref: (TM, K)   bf16 im2col patches
    # w_ref: (K, TN)   bf16 conv weights with BN scale folded in
    # b_ref: (1, TN)   f32 folded BN bias
    # o_ref: (TM, TN)  f32 output tile (lane-dense)
    acc = jnp.dot(p_ref[...], w_ref[...], preferred_element_type=jnp.float32)
    o_ref[...] = jnp.maximum(acc + b_ref[...], 0.0)


def _conv_bn_relu_kernel_acc(p_ref, w_ref, b_ref, o_ref, acc_ref):
    # General path: K is tiled; accumulate in f32 VMEM scratch and run the
    # bias+ReLU epilogue on the last K step.
    k = pl.program_id(2)

    @pl.when(k == 0)
    def _():
        acc_ref[...] = jnp.zeros_like(acc_ref)

    acc_ref[...] += jnp.dot(p_ref[...], w_ref[...],
                            preferred_element_type=jnp.float32)

    @pl.when(k == pl.num_programs(2) - 1)
    def _():
        o_ref[...] = jnp.maximum(acc_ref[...] + b_ref[...], 0.0)


# --------------------------------------------------------------------------
# Helpers
# --------------------------------------------------------------------------
def _round_up(x, m):
    return ((x + m - 1) // m) * m


def _same_pad(size, kernel, stride):
    out = -(-size // stride)  # ceil
    pad = max((out - 1) * stride + kernel - size, 0)
    return out, pad // 2, pad - pad // 2


def _pick_tiles(M, K, Cout_p):
    """Pick (TM, TK, TN) against a conservative VMEM budget."""
    # Output-channel tile: Cout_p is a multiple of 128, so a 128-divisor
    # always exists.
    if Cout_p <= 512:
        tn = Cout_p
    else:
        tn = next(t for t in (512, 256, 128) if Cout_p % t == 0)

    # Reduction tile: keep K whole when it is modest (single-K fast path),
    # otherwise tile it in lane-aligned chunks.
    tk = K if K <= 4096 else 2048

    kt = -(-K // tk)
    budget = 20 * 1024 * 1024  # leave headroom below the 32 MiB scoped limit
    tm = 128
    for cand in (1024, 512, 256, 128):
        foot = 2 * (cand * tk * 2 + tk * tn * 2 + tn * 4 + cand * tn * 4)
        if kt > 1:
            foot += cand * tn * 4  # accumulator scratch
        # Keep >= 2 row tiles when possible so the "parallel" axis has work
        # for v7x's two TensorCores.
        if foot <= budget and (M >= 2 * cand or cand == 128):
            tm = cand
            break
    return tm, tk, tn


# --------------------------------------------------------------------------
# Wrapper: Conv2dSame(bias=False) -> BatchNorm2d(eval) -> ReLU, NCHW in/out.
# --------------------------------------------------------------------------
def _basic_conv2d_forward(x_nchw, weight_oihw, gamma, beta, run_mean, run_var,
                          *, stride=1, eps=1e-3):
    N, Cin, H, W = x_nchw.shape
    Cout, Cin_w, KH, KW = weight_oihw.shape
    assert Cin == Cin_w
    sh = sw = int(stride)

    Ho, ph0, ph1 = _same_pad(H, KH, sh)
    Wo, pw0, pw1 = _same_pad(W, KW, sw)

    Cin_p = _round_up(Cin, 8)      # sublane alignment of the weight matrix
    Cout_p = _round_up(Cout, 128)  # lane-dense output stores
    K = KH * KW * Cin_p
    M = N * Ho * Wo

    TM, TK, TN = _pick_tiles(M, K, Cout_p)
    M_p = _round_up(M, TM)
    K_p = _round_up(K, TK)
    mt, nt, kt = M_p // TM, Cout_p // TN, K_p // TK

    # ---- im2col patches (XLA side), bf16 operands for the MXU --------------
    x = jnp.transpose(x_nchw, (0, 2, 3, 1)).astype(jnp.bfloat16)  # NHWC
    x = jnp.pad(x, ((0, 0), (ph0, ph1), (pw0, pw1), (0, Cin_p - Cin)))
    taps = []
    for kh in range(KH):          # striding done here, not inside the kernel
        for kw in range(KW):
            taps.append(x[:, kh:kh + (Ho - 1) * sh + 1:sh,
                          kw:kw + (Wo - 1) * sw + 1:sw, :])
    patches = jnp.concatenate(taps, axis=-1).reshape(M, K)
    patches = jnp.pad(patches, ((0, M_p - M), (0, K_p - K)))

    # ---- weights: fold BN scale, pad channels, tap-major repack ------------
    scale = (gamma / jnp.sqrt(run_var + eps)).astype(jnp.float32)
    bias = (beta - run_mean * scale).astype(jnp.float32)
    w = jnp.transpose(weight_oihw, (2, 3, 1, 0)).astype(jnp.float32)  # KH,KW,Ci,Co
    w = w * scale[None, None, None, :]                                # fold BN
    w = jnp.pad(w, ((0, 0), (0, 0), (0, Cin_p - Cin), (0, Cout_p - Cout)))
    w = w.reshape(K, Cout_p)
    w = jnp.pad(w, ((0, K_p - K), (0, 0))).astype(jnp.bfloat16)
    bias = jnp.pad(bias, (0, Cout_p - Cout)).reshape(1, Cout_p)

    if kt == 1:
        kernel = _conv_bn_relu_kernel_1k
        scratch = []
    else:
        kernel = _conv_bn_relu_kernel_acc
        scratch = [pltpu.VMEM((TM, TN), jnp.float32)]

    cost = pl.CostEstimate(
        flops=2 * M_p * K_p * Cout_p,
        transcendentals=0,
        bytes_accessed=(M_p * K_p * 2 + K_p * Cout_p * 2
                        + Cout_p * 4 + M_p * Cout_p * 4))

    out = pl.pallas_call(
        kernel,
        out_shape=jax.ShapeDtypeStruct((M_p, Cout_p), jnp.float32),
        grid=(mt, nt, kt),
        in_specs=[
            pl.BlockSpec((TM, TK), lambda i, j, k: (i, k)),   # patches
            pl.BlockSpec((TK, TN), lambda i, j, k: (k, j)),   # folded weights
            pl.BlockSpec((1, TN), lambda i, j, k: (0, j)),    # folded bias
        ],
        out_specs=pl.BlockSpec((TM, TN), lambda i, j, k: (i, j)),
        scratch_shapes=scratch,
        compiler_params=pltpu.CompilerParams(
            dimension_semantics=("parallel", "parallel", "arbitrary"),
            vmem_limit_bytes=32 * 1024 * 1024),
        cost_estimate=cost,
    )(patches, w, bias)

    out = out[:M, :Cout].reshape(N, Ho, Wo, Cout)
    return jnp.transpose(out, (0, 3, 1, 2)).astype(jnp.float32)  # NCHW


basic_conv2d_forward = jax.jit(_basic_conv2d_forward,
                               static_argnames=("stride", "eps"))


# --------------------------------------------------------------------------
# Pure-JAX f32 reference of the same forward pass (NCHW).
# --------------------------------------------------------------------------
def reference_forward(x, weight, gamma, beta, run_mean, run_var,
                      *, stride=1, eps=1e-3):
    _, _, H, W = x.shape
    _, _, KH, KW = weight.shape
    _, ph0, ph1 = _same_pad(H, KH, stride)
    _, pw0, pw1 = _same_pad(W, KW, stride)
    y = lax.conv_general_dilated(
        x.astype(jnp.float32), weight.astype(jnp.float32),
        window_strides=(stride, stride),
        padding=[(ph0, ph1), (pw0, pw1)],
        dimension_numbers=("NCHW", "OIHW", "NCHW"))
    inv = 1.0 / jnp.sqrt(run_var + eps)
    y = (y - run_mean[None, :, None, None]) * inv[None, :, None, None]
    y = y * gamma[None, :, None, None] + beta[None, :, None, None]
    return jnp.maximum(y, 0.0)


if __name__ == "__main__":
    # Small shapes consistent with BasicConv2d: in_planes=4, out_planes=8,
    # kernel_size=3, stride=1, activation='relu'.
    N, Cin, H, W = 2, 4, 16, 16
    Cout, Ksz, stride = 8, 3, 1

    key = jax.random.PRNGKey(0)
    kx, kw, kg, kb, km, kv = jax.random.split(key, 6)

    x = jax.random.normal(kx, (N, Cin, H, W), jnp.float32)
    weight = jax.random.normal(kw, (Cout, Cin, Ksz, Ksz), jnp.float32) * 0.1
    gamma = 0.5 + jax.random.uniform(kg, (Cout,), jnp.float32)
    beta = jax.random.normal(kb, (Cout,), jnp.float32) * 0.1
    run_mean = jax.random.normal(km, (Cout,), jnp.float32) * 0.1
    run_var = 0.5 + jax.random.uniform(kv, (Cout,), jnp.float32)

    out = basic_conv2d_forward(x, weight, gamma, beta, run_mean, run_var,
                               stride=stride, eps=1e-3)
    out = jax.block_until_ready(out)

    ref = reference_forward(x, weight, gamma, beta, run_mean, run_var,
                            stride=stride, eps=1e-3)
    ref = jax.block_until_ready(ref)

    assert out.shape == ref.shape == (N, Cout, H, W)
    # bf16 MXU operands => slightly looser tolerance than pure f32.
    max_err = float(jnp.max(jnp.abs(out - ref)))
    assert jnp.allclose(out, ref, atol=5e-2, rtol=5e-2), max_err

    print("KERNEL_OK")
</pallas_src>

<mosaic_0001>
module attributes {stable_mosaic.version = 11 : i64} {
  func.func @_conv_bn_relu_kernel_1k(%arg0: i32, %arg1: i32, %arg2: i32, %arg3: memref<256x72xbf16, #tpu.memory_space<vmem>>, %arg4: memref<72x128xbf16, #tpu.memory_space<vmem>>, %arg5: memref<1x128xf32, #tpu.memory_space<vmem>>, %arg6: memref<256x128xf32, #tpu.memory_space<vmem>>) attributes {dimension_semantics = [#tpu.dimension_semantics<parallel>, #tpu.dimension_semantics<parallel>, #tpu.dimension_semantics<arbitrary>], iteration_bounds = array<i64: 2, 1, 1>, scalar_prefetch = 0 : i64, scratch_operands = 0 : i64, tpu.core_type = #tpu.core_type<tc>, window_params = [{transform_indices = @transform_0, window_bounds = array<i64: 256, 72>}, {transform_indices = @transform_1, window_bounds = array<i64: 72, 128>}, {transform_indices = @transform_2, window_bounds = array<i64: 1, 128>}, {transform_indices = @transform_3, window_bounds = array<i64: 256, 128>}]} {
    %c0 = arith.constant 0 : index
    %c0_0 = arith.constant 0 : index
    %0 = vector.load %arg3[%c0, %c0_0] : memref<256x72xbf16, #tpu.memory_space<vmem>>, vector<256x72xbf16>
    %c0_1 = arith.constant 0 : index
    %c0_2 = arith.constant 0 : index
    %1 = vector.load %arg4[%c0_1, %c0_2] : memref<72x128xbf16, #tpu.memory_space<vmem>>, vector<72x128xbf16>
    %cst = arith.constant dense<0.000000e+00> : vector<256x128xf32>
    %2 = tpu.matmul %0, %1, %cst {dimension_numbers = #tpu.dot_dimension_numbers<[1], [0], [0], [1], [0, 0, 1, 1], [], []>} : vector<256x72xbf16>, vector<72x128xbf16>, vector<256x128xf32> -> vector<256x128xf32>
    %c0_3 = arith.constant 0 : index
    %c0_4 = arith.constant 0 : index
    %3 = vector.load %arg5[%c0_3, %c0_4] : memref<1x128xf32, #tpu.memory_space<vmem>>, vector<1x128xf32>
    %4 = vector.broadcast %3 : vector<1x128xf32> to vector<256x128xf32>
    %5 = arith.addf %2, %4 : vector<256x128xf32>
    %cst_5 = arith.constant 0.000000e+00 : f32
    %6 = vector.broadcast %cst_5 : f32 to vector<256x128xf32>
    %7 = arith.maximumf %5, %6 : vector<256x128xf32>
    %c0_6 = arith.constant 0 : index
    %c0_7 = arith.constant 0 : index
    %8 = vector.load %arg6[%c0_6, %c0_7] : memref<256x128xf32, #tpu.memory_space<vmem>>, vector<256x128xf32>
    tpu.vector_store %arg6[%c0_6, %c0_7], %7 {strides = array<i32>} : memref<256x128xf32, #tpu.memory_space<vmem>>, vector<256x128xf32>,
    return
  }
  func.func @transform_0(%arg0: i32, %arg1: i32, %arg2: i32) -> (i32, i32) {
    %c0_i32 = arith.constant 0 : i32
    return %arg0, %arg2 : i32, i32
  }
  func.func @transform_1(%arg0: i32, %arg1: i32, %arg2: i32) -> (i32, i32) {
    %c0_i32 = arith.constant 0 : i32
    return %arg2, %arg1 : i32, i32
  }
  func.func @transform_2(%arg0: i32, %arg1: i32, %arg2: i32) -> (i32, i32) {
    %c0_i32 = arith.constant 0 : i32
    %c0_i32_0 = arith.constant 0 : i32
    return %c0_i32, %arg1 : i32, i32
  }
  func.func @transform_3(%arg0: i32, %arg1: i32, %arg2: i32) -> (i32, i32) {
    %c0_i32 = arith.constant 0 : i32
    return %arg0, %arg1 : i32, i32
  }
}

</mosaic_0001>

<llo_original>
// kernel: _basic_conv2d_forward.1
$region0: #{_basic_conv2d_forward.1}
  #allocation0 [shape = 'u32[]', space=smem, size = 0x4, offset = 0x4, fixed_abs, tag = 'smem constant byte address 0x4 - core index']
  #allocation1 [shape = 'u32[144,128]{1,0:T(1,128)}', space=vmem, size = 0x12000, scoped, tag = 'internal scratch']
  %s0 = inlined_call_operand.vmem [shape: bf16[512,72], index: 0, kind: input, shape index: {}]
  %s1 = inlined_call_operand.vmem [shape: bf16[72,128], index: 1, kind: input, shape index: {}]
  %s2 = inlined_call_operand.vmem [shape: f32[1,128], index: 2, kind: input, shape index: {}]
  %s3 = inlined_call_operand.vmem [shape: f32[512,128], index: 3, kind: output, shape index: {}]
  %s4 = sld [smem:[#allocation0]]
  $region45: #{_basic_conv2d_forward.1} parent=0
    _
  %s6 = ssub.s32 1, %s4
  %s7 = scalar_select 0, %s6, %s4
  loop: start=0, step=1, limit=4
  $region2: #{_basic_conv2d_forward.1} parent=0 // loop_pre_header
    _
  $region3: #{_basic_conv2d_forward.1} parent=0 // loop_header
    %s9 = sphi 0, %s13
    %p10 = scmp.ge.s32.totalorder %s9, 4
    %s16 = sphi 0, %s35
    %s17 = sphi 0, %s31
    %s18 = sphi 0, %s27
    %s19 = sphi 0, %s16
    %s20 = sphi 0, %s17
    %s21 = sphi 0, %s18
    %s22 = sphi 0, %s19
    %s23 = sphi 0, %s20
    %s24 = sphi 0, %s21
    %s40 = sphi 0, %s42
    %s43 = sphi 0, %s40
    %s44 = sphi 0, %s43
    %s60 = sphi 0, %s44
    %s68 = sphi 0, %s70
    %s71 = sphi 0, %s68
    %s72 = sphi 0, %s71
    %s88 = sphi 0, %s72
    %s94 = sphi 0, %s96
    %s97 = sphi 0, %s94
    %s98 = sphi 0, %s97
    %s114 = sphi 0, %s98
    %s122 = sphi 0, %s124
    %s125 = sphi 0, %s122
    %s126 = sphi 0, %s125
    %s142 = sphi 0, %s126
  $region4: #{_basic_conv2d_forward.1} parent=0 // loop_header_branch
    %12 = sbr.rel (%p10) target = $region8
  $region5: #{_basic_conv2d_forward.1} parent=0 // loop_body
    %s14 = ssub.s32 %s9, 1
    %s15 = ssub.s32 %s9, 2
    %s25 = sadd.s32 1, %s18
    %p26 = scmp.ge.s32.totalorder %s25, 1
    %s27 = scalar_select %p26, 0, %s25
    %s28 = sadd.s32 1, %s17
    %s29 = scalar_select %p26, %s28, %s17
    %p30 = scmp.ge.s32.totalorder %s29, 1
    %s31 = scalar_select %p30, 0, %s29
    %s32 = sadd.s32 1, %s16
    %s33 = scalar_select %p30, %s32, %s16
    %p34 = scmp.ge.s32.totalorder %s33, 2
    %s35 = scalar_select %p34, 0, %s33
    %s36 = ssub.s32 %s16, %s35
    %s37 = ssub.s32 %s18, %s27
    %s38 = sor.u32 %s36, %s37
    %p39 = scmp.eq.s32.totalorder %s38, 0
    %s41 = sadd.s32 %s40, 1
    %s42 = scalar_select %p39, %s40, %s41
    %p45 = pneg %p39
    %p46 = scmp.eq.s32.totalorder %s9, 1
    %p47 = por %p45, %p46
    %p48 = scmp.ne.s32.totalorder %s40, %s43
    %p49 = scmp.eq.s32.totalorder %s9, 0
    %p50 = por %p48, %p49
    %p51 = scmp.ne.s32.totalorder %s40, %s43
    %p52 = scmp.eq.s32.totalorder %s14, 1
    %p53 = por %p51, %p52
    %p54 = scmp.ne.s32.totalorder %s43, %s44
    %p55 = scmp.eq.s32.totalorder %s14, 0
    %p56 = por %p54, %p55
    %p57 = scmp.ne.s32.totalorder %s43, %s44
    %p58 = scmp.eq.s32.totalorder %s15, 1
    %p59 = por %p57, %p58
    %p61 = scmp.ne.s32.totalorder %s44, %s60
    %p62 = scmp.eq.s32.totalorder %s15, 0
    %p63 = por %p61, %p62
    %s64 = ssub.s32 %s18, %s27
    %s65 = ssub.s32 %s17, %s31
    %s66 = sor.u32 %s64, %s65
    %p67 = scmp.eq.s32.totalorder %s66, 0
    %s69 = sadd.s32 %s68, 1
    %s70 = scalar_select %p67, %s68, %s69
    %p73 = pneg %p67
    %p74 = scmp.eq.s32.totalorder %s9, 1
    %p75 = por %p73, %p74
    %p76 = scmp.ne.s32.totalorder %s68, %s71
    %p77 = scmp.eq.s32.totalorder %s9, 0
    %p78 = por %p76, %p77
    %p79 = scmp.ne.s32.totalorder %s68, %s71
    %p80 = scmp.eq.s32.totalorder %s14, 1
    %p81 = por %p79, %p80
    %p82 = scmp.ne.s32.totalorder %s71, %s72
    %p83 = scmp.eq.s32.totalorder %s14, 0
    %p84 = por %p82, %p83
    %p85 = scmp.ne.s32.totalorder %s71, %s72
    %p86 = scmp.eq.s32.totalorder %s15, 1
    %p87 = por %p85, %p86
    %p89 = scmp.ne.s32.totalorder %s72, %s88
    %p90 = scmp.eq.s32.totalorder %s15, 0
    %p91 = por %p89, %p90
    %s92 = ssub.s32 %s17, %s31
    %p93 = scmp.eq.s32.totalorder %s92, 0
    %s95 = sadd.s32 %s94, 1
    %s96 = scalar_select %p93, %s94, %s95
    %p99 = pneg %p93
    %p100 = scmp.eq.s32.totalorder %s9, 1
    %p101 = por %p99, %p100
    %p102 = scmp.ne.s32.totalorder %s94, %s97
    %p103 = scmp.eq.s32.totalorder %s9, 0
    %p104 = por %p102, %p103
    %p105 = scmp.ne.s32.totalorder %s94, %s97
    %p106 = scmp.eq.s32.totalorder %s14, 1
    %p107 = por %p105, %p106
    %p108 = scmp.ne.s32.totalorder %s97, %s98
    %p109 = scmp.eq.s32.totalorder %s14, 0
    %p110 = por %p108, %p109
    %p111 = scmp.ne.s32.totalorder %s97, %s98
    %p112 = scmp.eq.s32.totalorder %s15, 1
    %p113 = por %p111, %p112
    %p115 = scmp.ne.s32.totalorder %s98, %s114
    %p116 = scmp.eq.s32.totalorder %s15, 0
    %p117 = por %p115, %p116
    %s118 = ssub.s32 %s16, %s35
    %s119 = ssub.s32 %s17, %s31
    %s120 = sor.u32 %s118, %s119
    %p121 = scmp.eq.s32.totalorder %s120, 0
    %s123 = sadd.s32 %s122, 1
    %s124 = scalar_select %p121, %s122, %s123
    %p127 = pneg %p121
    %p128 = scmp.eq.s32.totalorder %s9, 1
    %p129 = por %p127, %p128
    %p130 = scmp.ne.s32.totalorder %s122, %s125
    %p131 = scmp.eq.s32.totalorder %s9, 0
    %p132 = por %p130, %p131
    %p133 = scmp.ne.s32.totalorder %s122, %s125
    %p134 = scmp.eq.s32.totalorder %s14, 1
    %p135 = por %p133, %p134
    %p136 = scmp.ne.s32.totalorder %s125, %s126
    %p137 = scmp.eq.s32.totalorder %s14, 0
    %p138 = por %p136, %p137
    %p139 = scmp.ne.s32.totalorder %s125, %s126
    %p140 = scmp.eq.s32.totalorder %s15, 1
    %p141 = por %p139, %p140
    %p143 = scmp.ne.s32.totalorder %s126, %s142
    %p144 = scmp.eq.s32.totalorder %s15, 0
    %p145 = por %p143, %p144
    %p146 = scmp.le.s32.totalorder 1, %s9
    %p147 = scmp.lt.s32.totalorder %s9, 3
    %p148 = pnand %p146, %p147
    %p149 = pneg %p148
    // Predicated region
    $region9: #{_basic_conv2d_forward.1} parent=5 // pred_check
      _
    $region10: #{_basic_conv2d_forward.1} parent=5 // pred_check_branch
      %151 = sbr.rel (%p148) target = $region12
    $region11: #{_basic_conv2d_forward.1} parent=5 // pred_region
      %s152 = ssub.s32 %s9, 1
      // Predicated region
      $region13: #{_basic_conv2d_forward.1} parent=11 // pred_check
        %p153 = pneg %p84
      $region14: #{_basic_conv2d_forward.1} parent=11 // pred_check_branch
        %155 = sbr.rel (%p153) target = $region16
      $region15: #{_basic_conv2d_forward.1} parent=11 // pred_region
        %s156 = smul.u32 9, %s21
        %p157 = scmp.lt.s32.totalorder %s156, 8
        %s158 = scalar_select %p157, %s156, 8
        %p159 = scmp.lt.s32.totalorder %s20, 0
        %s160 = scalar_select %p159, %s20, 0
        %s161 = sadd.s32 %s160, %s158
        %s162 = smul.addr %s161, 4
        %s163 = scalar_lea.vmem %s1, %s162
        %s164 = smul.u32 9, %s21
      $region16: #{_basic_conv2d_forward.1} parent=11 // pred_fallthru
        _
      // Predicated region
      $region17: #{_basic_conv2d_forward.1} parent=11 // pred_check
        %p165 = pneg %p110
      $region18: #{_basic_conv2d_forward.1} parent=11 // pred_check_branch
        %167 = sbr.rel (%p165) target = $region20
      $region19: #{_basic_conv2d_forward.1} parent=11 // pred_region
        %p168 = scmp.lt.s32.totalorder %s20, 0
        %s169 = scalar_select %p168, %s20, 0
        %s170 = scalar_lea.vmem %s2, %s169
      $region20: #{_basic_conv2d_forward.1} parent=11 // pred_fallthru
        _
    $region12: #{_basic_conv2d_forward.1} parent=5 // pred_fallthru
      _
    %p171 = scmp.lt.s32.totalorder %s9, 2
    // Predicated region
    $region21: #{_basic_conv2d_forward.1} parent=5 // pred_check
      %p172 = pneg %p171
    $region22: #{_basic_conv2d_forward.1} parent=5 // pred_check_branch
      %174 = sbr.rel (%p172) target = $region24
    $region23: #{_basic_conv2d_forward.1} parent=5 // pred_region
      // Predicated region
      $region25: #{_basic_conv2d_forward.1} parent=23 // pred_check
        %p175 = pneg %p50
      $region26: #{_basic_conv2d_forward.1} parent=23 // pred_check_branch
        %177 = sbr.rel (%p175) target = $region28
      $region27: #{_basic_conv2d_forward.1} parent=23 // pred_region
        %s178 = smul.u32 32, %s16
        %p179 = scmp.lt.s32.totalorder %s178, 63
        %s180 = scalar_select %p179, %s178, 63
        %p181 = scmp.lt.s32.totalorder %s18, 0
        %s182 = scalar_select %p181, %s18, 0
        %s183 = sadd.s32 %s182, %s180
        %s184 = smul.addr %s183, 4
        %s185 = scalar_lea.vmem %s0, %s184
        %s186 = smul.u32 32, %s16
      $region28: #{_basic_conv2d_forward.1} parent=23 // pred_fallthru
        _
    $region24: #{_basic_conv2d_forward.1} parent=5 // pred_fallthru
      _
    %p187 = scmp.le.s32.totalorder 1, %s9
    %p188 = scmp.lt.s32.totalorder %s9, 3
    %p189 = pnand %p187, %p188
    %p190 = pneg %p189
    // Predicated region
    $region29: #{_basic_conv2d_forward.1} parent=5 // pred_check
      _
    $region30: #{_basic_conv2d_forward.1} parent=5 // pred_check_branch
      %192 = sbr.rel (%p189) target = $region32
    $region31: #{_basic_conv2d_forward.1} parent=5 // pred_region
      %s193 = ssub.s32 %s9, 1
      %s194 = smul.u32 32, %s19
      %p195 = scmp.lt.s32.totalorder %s194, 63
      %s196 = scalar_select %p195, %s194, 63
      %p197 = scmp.lt.s32.totalorder %s21, 0
      %s198 = scalar_select %p197, %s21, 0
      %s199 = sadd.s32 %s198, %s196
      %s200 = smul.addr %s199, 4
      %s201 = scalar_lea.vmem %s0, %s200
      %p202 = pneg %p56
      %p203 = pneg %p53
      %s204 = smul.u32 9, %s21
      %p205 = scmp.lt.s32.totalorder %s204, 8
      %s206 = scalar_select %p205, %s204, 8
      %p207 = scmp.lt.s32.totalorder %s20, 0
      %s208 = scalar_select %p207, %s20, 0
      %s209 = sadd.s32 %s208, %s206
      %s210 = smul.addr %s209, 4
      %s211 = scalar_lea.vmem %s1, %s210
      %p212 = pneg %p84
      %p213 = pneg %p81
      %p214 = scmp.lt.s32.totalorder %s20, 0
      %s215 = scalar_select %p214, %s20, 0
      %s216 = scalar_lea.vmem %s2, %s215
      %p217 = pneg %p110
      %p218 = pneg %p107
      %p219 = pneg %p138
      %p220 = pneg %p135
      %s221 = smul.u32 32, %s19
      %p222 = scmp.lt.s32.totalorder %s221, 63
      %s223 = scalar_select %p222, %s221, 63
      %p224 = scmp.lt.s32.totalorder %s20, 0
      %s225 = scalar_select %p224, %s20, 0
      %s226 = sadd.s32 %s225, %s223
      %s227 = smul.addr %s226, 8
      %s228 = scalar_lea.vmem %s3, %s227
      %s229 = smul.u32 32, %s19
      %p230 = scmp.lt.s32.totalorder %s229, 63
      %s231 = scalar_select %p230, %s229, 63
      %p232 = scmp.lt.s32.totalorder %s21, 0
      %s233 = scalar_select %p232, %s21, 0
      %s234 = sadd.s32 %s233, %s231
      %s235 = smul.addr %s234, 4
      %s236 = scalar_lea.vmem %s0, %s235
      %s237 = smul.u32 32, %s19
      %s238 = smul.u32 9, %s21
      %p239 = scmp.lt.s32.totalorder %s238, 8
      %s240 = scalar_select %p239, %s238, 8
      %p241 = scmp.lt.s32.totalorder %s20, 0
      %s242 = scalar_select %p241, %s20, 0
      %s243 = sadd.s32 %s242, %s240
      %s244 = smul.addr %s243, 4
      %s245 = scalar_lea.vmem %s1, %s244
      %s246 = smul.u32 9, %s21
      %p247 = scmp.lt.s32.totalorder %s20, 0
      %s248 = scalar_select %p247, %s20, 0
      %s249 = scalar_lea.vmem %s2, %s248
      %s250 = smul.u32 32, %s19
      %p251 = scmp.lt.s32.totalorder %s250, 63
      %s252 = scalar_select %p251, %s250, 63
      %p253 = scmp.lt.s32.totalorder %s20, 0
      %s254 = scalar_select %p253, %s20, 0
      %s255 = sadd.s32 %s254, %s252
      %s256 = smul.addr %s255, 8
      %s257 = scalar_lea.vmem %s3, %s256
      %s258 = smul.u32 32, %s19
      %v260 = vld [vmem:[%s236] sm:$0xf]
      %v261 = vld [vmem:[%s236 + $0x4] sm:$0xf]
      %v262 = vld [vmem:[%s236 + $0x8] sm:$0xf]
      %v263 = vld [vmem:[%s236 + $0xc] sm:$0xf]
      %v264 = vld [vmem:[%s236 + $0x10] sm:$0xf]
      %v265 = vld [vmem:[%s236 + $0x14] sm:$0xf]
      %v266 = vld [vmem:[%s236 + $0x18] sm:$0xf]
      %v267 = vld [vmem:[%s236 + $0x1c] sm:$0xf]
      %v268 = vld [vmem:[%s236 + $0x20] sm:$0xf]
      %v269 = vld [vmem:[%s236 + $0x24] sm:$0xf]
      %v270 = vld [vmem:[%s236 + $0x28] sm:$0xf]
      %v271 = vld [vmem:[%s236 + $0x2c] sm:$0xf]
      %v272 = vld [vmem:[%s236 + $0x30] sm:$0xf]
      %v273 = vld [vmem:[%s236 + $0x34] sm:$0xf]
      %v274 = vld [vmem:[%s236 + $0x38] sm:$0xf]
      %v275 = vld [vmem:[%s236 + $0x3c] sm:$0xf]
      %v276 = vld [vmem:[%s236 + $0x40] sm:$0xf]
      %v277 = vld [vmem:[%s236 + $0x44] sm:$0xf]
      %v278 = vld [vmem:[%s236 + $0x48] sm:$0xf]
      %v279 = vld [vmem:[%s236 + $0x4c] sm:$0xf]
      %v280 = vld [vmem:[%s236 + $0x50] sm:$0xf]
      %v281 = vld [vmem:[%s236 + $0x54] sm:$0xf]
      %v282 = vld [vmem:[%s236 + $0x58] sm:$0xf]
      %v283 = vld [vmem:[%s236 + $0x5c] sm:$0xf]
      %v284 = vld [vmem:[%s236 + $0x60] sm:$0xf]
      %v285 = vld [vmem:[%s236 + $0x64] sm:$0xf]
      %v286 = vld [vmem:[%s236 + $0x68] sm:$0xf]
      %v287 = vld [vmem:[%s236 + $0x6c] sm:$0xf]
      %v288 = vld [vmem:[%s236 + $0x70] sm:$0xf]
      %v289 = vld [vmem:[%s236 + $0x74] sm:$0xf]
      %v290 = vld [vmem:[%s236 + $0x78] sm:$0xf]
      %v291 = vld [vmem:[%s236 + $0x7c] sm:$0xf]
      %v292 = vld [vmem:[%s245] sm:$0xf]
      %v293 = vld [vmem:[%s245 + $0x4] sm:$0xf]
      %v294 = vld [vmem:[%s245 + $0x8] sm:$0xf]
      %v295 = vld [vmem:[%s245 + $0xc] sm:$0xf]
      %v296 = vld [vmem:[%s245 + $0x10] sm:$0xf]
      %v297 = vld [vmem:[%s245 + $0x14] sm:$0xf]
      %v298 = vld [vmem:[%s245 + $0x18] sm:$0xf]
      %v299 = vld [vmem:[%s245 + $0x1c] sm:$0xf]
      %v300 = vld [vmem:[%s245 + $0x20] sm:$0xf]
      %v301 = vld [vmem:[%s249] sm:$0x1]
      %v303 = vlaneseq
      %v304 = vshrl.u32 %v303, 7
      %v305 = vsub.s32 0, %v304
      %v306 = vrot.slane %v301, %v305
      %v340 = vunpack.c.l.b16 %v260
      %v341 = vunpack.c.l.b16 %v261
      %v342 = vunpack.c.l.b16 %v262
      %v343 = vunpack.c.l.b16 %v263
      %v344 = vunpack.c.l.b16 %v264
      %v345 = vunpack.c.l.b16 %v265
      %v346 = vunpack.c.l.b16 %v266
      %v347 = vunpack.c.l.b16 %v267
      %v348 = vunpack.c.l.b16 %v268
      %v349 = vunpack.c.l.b16 %v269
      %v350 = vunpack.c.l.b16 %v270
      %v351 = vunpack.c.l.b16 %v271
      %v352 = vunpack.c.l.b16 %v272
      %v353 = vunpack.c.l.b16 %v273
      %v354 = vunpack.c.l.b16 %v274
      %v355 = vunpack.c.l.b16 %v275
      %v356 = vunpack.c.l.b16 %v276
      %v357 = vunpack.c.l.b16 %v277
      %v358 = vunpack.c.l.b16 %v278
      %v359 = vunpack.c.l.b16 %v279
      %v360 = vunpack.c.l.b16 %v280
      %v361 = vunpack.c.l.b16 %v281
      %v362 = vunpack.c.l.b16 %v282
      %v363 = vunpack.c.l.b16 %v283
      %v364 = vunpack.c.l.b16 %v284
      %v365 = vunpack.c.l.b16 %v285
      %v366 = vunpack.c.l.b16 %v286
      %v367 = vunpack.c.l.b16 %v287
      %v368 = vunpack.c.l.b16 %v288
      %v369 = vunpack.c.l.b16 %v289
      %v370 = vunpack.c.l.b16 %v290
      %v371 = vunpack.c.l.b16 %v291
      %v372 = vpack.c.b16 %v341, %v340
      %v373 = vpack.c.b16 %v343, %v342
      %v374 = vpack.c.b16 %v345, %v344
      %v375 = vpack.c.b16 %v347, %v346
      %v376 = vpack.c.b16 %v349, %v348
      %v377 = vpack.c.b16 %v351, %v350
      %v378 = vpack.c.b16 %v353, %v352
      %v379 = vpack.c.b16 %v355, %v354
      %v380 = vpack.c.b16 %v357, %v356
      %v381 = vpack.c.b16 %v359, %v358
      %v382 = vpack.c.b16 %v361, %v360
      %v383 = vpack.c.b16 %v363, %v362
      %v384 = vpack.c.b16 %v365, %v364
      %v385 = vpack.c.b16 %v367, %v366
      %v386 = vpack.c.b16 %v369, %v368
      %v387 = vpack.c.b16 %v371, %v370
      %v397 = vunpack.c.l.b16 %v292
      %v398 = vunpack.c.l.b16 %v293
      %v399 = vunpack.c.l.b16 %v294
      %v400 = vunpack.c.l.b16 %v295
      %v401 = vunpack.c.l.b16 %v296
      %v402 = vunpack.c.l.b16 %v297
      %v403 = vunpack.c.l.b16 %v298
      %v404 = vunpack.c.l.b16 %v299
      %v405 = vunpack.c.l.b16 %v300
      %v406 = vpack.c.b16 %v398, %v397
      %v407 = vpack.c.b16 %v400, %v399
      %v408 = vpack.c.b16 %v402, %v401
      %v409 = vpack.c.b16 %v404, %v403
      %v410 = vpack.c.b16 %v405, %v405
      %vm415 = vcmask 588800
      %v417 = vsel %vm415, %v372, 0
      %v420 = vsel %vm415, %v373, 0
      %v423 = vsel %vm415, %v374, 0
      %v426 = vsel %vm415, %v375, 0
      %v429 = vsel %vm415, %v376, 0
      %v432 = vsel %vm415, %v377, 0
      %v435 = vsel %vm415, %v378, 0
      %v438 = vsel %vm415, %v379, 0
      %v441 = vsel %vm415, %v380, 0
      %v444 = vsel %vm415, %v381, 0
      %v447 = vsel %vm415, %v382, 0
      %v450 = vsel %vm415, %v383, 0
      %v453 = vsel %vm415, %v384, 0
      %v456 = vsel %vm415, %v385, 0
      %v459 = vsel %vm415, %v386, 0
      %v462 = vsel %vm415, %v387, 0
      %vm464 = vcmask 1043456
      %v466 = vsel %vm464, %v410, 0
      %468 = vmatprep.subr.bf16.mxu0 0
      %469 = vmatpush1.bf16.msra.mxu0 0
      %470 = vmatprep.subr.bf16.mxu0 0
      %471 = vmatpush1.bf16.msra.mxu0 0
      %472 = vmatprep.subr.bf16.mxu0 0
      %473 = vmatpush1.bf16.msra.mxu0 0
      %474 = vmatprep.subr.bf16.mxu0 0
      %475 = vmatpush1.bf16.msra.mxu0 %v466
      %476 = vmatprep.subr.bf16.mxu0 0
      %477 = vmatpush1.bf16.msra.mxu0 %v409
      %478 = vmatprep.subr.bf16.mxu0 0
      %479 = vmatpush1.bf16.msra.mxu0 %v408
      %480 = vmatprep.subr.bf16.mxu0 0
      %481 = vmatpush1.bf16.msra.mxu0 %v407
      %482 = vmatprep.subr.bf16.mxu0 0
      %483 = vmatpush1.bf16.msra.mxu0 %v406
      %484 = vmatprep.subr.bf16.mxu0 0
      %485 = vmatpush2.bf16.msra.mxu0 0
      %486 = vmatprep.subr.bf16.mxu0 0
      %487 = vmatpush2.bf16.msra.mxu0 0
      %488 = vmatprep.subr.bf16.mxu0 0
      %489 = vmatpush2.bf16.msra.mxu0 0
      %490 = vmatprep.subr.bf16.mxu0 0
      %491 = vmatpush2.bf16.msra.mxu0 0
      %492 = vmatprep.subr.bf16.mxu0 0
      %493 = vmatpush2.bf16.msra.mxu0 0
      %494 = vmatprep.subr.bf16.mxu0 0
      %495 = vmatpush2.bf16.msra.mxu0 0
      %496 = vmatprep.subr.bf16.mxu0 0
      %497 = vmatpush2.bf16.msra.mxu0 0
      %498 = vmatprep.subr.bf16.mxu0 0
      %499 = vmatpush2.bf16.msra.mxu0 0
      %500 = vmatprep.mubr.bf16.mxu0 0
      %501 = vmatmul.mubr.bf16.gmra.mxu0 %v417
      %v502 = vpop.f32.mrf.mxu0
      %v503 = vadd.f32 %v306, %v502
      %v504 = vpop.f32.mrf.mxu0
      %v505 = vpop.f32.mrf.mxu0
      %v506 = vadd.f32 %v306, %v505
      %v507 = vpop.f32.mrf.mxu0
      %508 = vmatprep.mubr.bf16.mxu0 0
      %509 = vmatmul.mubr.bf16.gmra.mxu0 %v420
      %v510 = vpop.f32.mrf.mxu0
      %v511 = vadd.f32 %v306, %v510
      %v512 = vpop.f32.mrf.mxu0
      %v513 = vpop.f32.mrf.mxu0
      %v514 = vadd.f32 %v306, %v513
      %v515 = vpop.f32.mrf.mxu0
      %516 = vmatprep.mubr.bf16.mxu0 0
      %517 = vmatmul.mubr.bf16.gmra.mxu0 %v423
      %v518 = vpop.f32.mrf.mxu0
      %v519 = vadd.f32 %v306, %v518
      %v520 = vpop.f32.mrf.mxu0
      %v521 = vpop.f32.mrf.mxu0
      %v522 = vadd.f32 %v306, %v521
      %v523 = vpop.f32.mrf.mxu0
      %524 = vmatprep.mubr.bf16.mxu0 0
      %525 = vmatmul.mubr.bf16.gmra.mxu0 %v426
      %v526 = vpop.f32.mrf.mxu0
      %v527 = vadd.f32 %v306, %v526
      %v528 = vpop.f32.mrf.mxu0
      %v529 = vpop.f32.mrf.mxu0
      %v530 = vadd.f32 %v306, %v529
      %v531 = vpop.f32.mrf.mxu0
      %532 = vmatprep.mubr.bf16.mxu0 0
      %533 = vmatmul.mubr.bf16.gmra.mxu0 %v429
      %v534 = vpop.f32.mrf.mxu0
      %v535 = vadd.f32 %v306, %v534
      %v536 = vpop.f32.mrf.mxu0
      %v537 = vpop.f32.mrf.mxu0
      %v538 = vadd.f32 %v306, %v537
      %v539 = vpop.f32.mrf.mxu0
      %540 = vmatprep.mubr.bf16.mxu0 0
      %541 = vmatmul.mubr.bf16.gmra.mxu0 %v432
      %v542 = vpop.f32.mrf.mxu0
      %v543 = vadd.f32 %v306, %v542
      %v544 = vpop.f32.mrf.mxu0
      %v545 = vpop.f32.mrf.mxu0
      %v546 = vadd.f32 %v306, %v545
      %v547 = vpop.f32.mrf.mxu0
      %548 = vmatprep.mubr.bf16.mxu0 0
      %549 = vmatmul.mubr.bf16.gmra.mxu0 %v435
      %v550 = vpop.f32.mrf.mxu0
      %v551 = vadd.f32 %v306, %v550
      %v552 = vpop.f32.mrf.mxu0
      %v553 = vpop.f32.mrf.mxu0
      %v554 = vadd.f32 %v306, %v553
      %v555 = vpop.f32.mrf.mxu0
      %556 = vmatprep.mubr.bf16.mxu0 0
      %557 = vmatmul.mubr.bf16.gmra.mxu0 %v438
      %v558 = vpop.f32.mrf.mxu0
      %v559 = vadd.f32 %v306, %v558
      %v560 = vpop.f32.mrf.mxu0
      %v561 = vpop.f32.mrf.mxu0
      %v562 = vadd.f32 %v306, %v561
      %v563 = vpop.f32.mrf.mxu0
      %564 = vmatprep.mubr.bf16.mxu0 0
      %565 = vmatmul.mubr.bf16.gmra.mxu0 %v441
      %v566 = vpop.f32.mrf.mxu0
      %v567 = vadd.f32 %v306, %v566
      %v568 = vpop.f32.mrf.mxu0
      %v569 = vpop.f32.mrf.mxu0
      %v570 = vadd.f32 %v306, %v569
      %v571 = vpop.f32.mrf.mxu0
      %572 = vmatprep.mubr.bf16.mxu0 0
      %573 = vmatmul.mubr.bf16.gmra.mxu0 %v444
      %v574 = vpop.f32.mrf.mxu0
      %v575 = vadd.f32 %v306, %v574
      %v576 = vpop.f32.mrf.mxu0
      %v577 = vpop.f32.mrf.mxu0
      %v578 = vadd.f32 %v306, %v577
      %v579 = vpop.f32.mrf.mxu0
      %580 = vmatprep.mubr.bf16.mxu0 0
      %581 = vmatmul.mubr.bf16.gmra.mxu0 %v447
      %v582 = vpop.f32.mrf.mxu0
      %v583 = vadd.f32 %v306, %v582
      %v584 = vpop.f32.mrf.mxu0
      %v585 = vpop.f32.mrf.mxu0
      %v586 = vadd.f32 %v306, %v585
      %v587 = vpop.f32.mrf.mxu0
      %588 = vmatprep.mubr.bf16.mxu0 0
      %589 = vmatmul.mubr.bf16.gmra.mxu0 %v450
      %v590 = vpop.f32.mrf.mxu0
      %v591 = vadd.f32 %v306, %v590
      %v592 = vpop.f32.mrf.mxu0
      %v593 = vpop.f32.mrf.mxu0
      %v594 = vadd.f32 %v306, %v593
      %v595 = vpop.f32.mrf.mxu0
      %596 = vmatprep.mubr.bf16.mxu0 0
      %597 = vmatmul.mubr.bf16.gmra.mxu0 %v453
      %v598 = vpop.f32.mrf.mxu0
      %v599 = vadd.f32 %v306, %v598
      %v600 = vpop.f32.mrf.mxu0
      %v601 = vpop.f32.mrf.mxu0
      %v602 = vadd.f32 %v306, %v601
      %v603 = vpop.f32.mrf.mxu0
      %604 = vmatprep.mubr.bf16.mxu0 0
      %605 = vmatmul.mubr.bf16.gmra.mxu0 %v456
      %v606 = vpop.f32.mrf.mxu0
      %v607 = vadd.f32 %v306, %v606
      %v608 = vpop.f32.mrf.mxu0
      %v609 = vpop.f32.mrf.mxu0
      %v610 = vadd.f32 %v306, %v609
      %v611 = vpop.f32.mrf.mxu0
      %612 = vmatprep.mubr.bf16.mxu0 0
      %613 = vmatmul.mubr.bf16.gmra.mxu0 %v459
      %v614 = vpop.f32.mrf.mxu0
      %v615 = vadd.f32 %v306, %v614
      %v616 = vpop.f32.mrf.mxu0
      %v617 = vpop.f32.mrf.mxu0
      %v618 = vadd.f32 %v306, %v617
      %v619 = vpop.f32.mrf.mxu0
      %620 = vmatprep.mubr.bf16.mxu0 0
      %621 = vmatmul.mubr.bf16.gmra.mxu0 %v462
      %v622 = vpop.f32.mrf.mxu0
      %v623 = vadd.f32 %v306, %v622
      %v624 = vpop.f32.mrf.mxu0
      %v625 = vpop.f32.mrf.mxu0
      %v626 = vadd.f32 %v306, %v625
      %v627 = vpop.f32.mrf.mxu0
      %628 = vdwg.mxu0
      %v629 = vmax.f32 %v503, 0.0
      %v630 = vmax.f32 %v506, 0.0
      %v631 = vmax.f32 %v511, 0.0
      %v632 = vmax.f32 %v514, 0.0
      %v633 = vmax.f32 %v519, 0.0
      %v634 = vmax.f32 %v522, 0.0
      %v635 = vmax.f32 %v527, 0.0
      %v636 = vmax.f32 %v530, 0.0
      %v637 = vmax.f32 %v535, 0.0
      %v638 = vmax.f32 %v538, 0.0
      %v639 = vmax.f32 %v543, 0.0
      %v640 = vmax.f32 %v546, 0.0
      %v641 = vmax.f32 %v551, 0.0
      %v642 = vmax.f32 %v554, 0.0
      %v643 = vmax.f32 %v559, 0.0
      %v644 = vmax.f32 %v562, 0.0
      %v645 = vmax.f32 %v567, 0.0
      %v646 = vmax.f32 %v570, 0.0
      %v647 = vmax.f32 %v575, 0.0
      %v648 = vmax.f32 %v578, 0.0
      %v649 = vmax.f32 %v583, 0.0
      %v650 = vmax.f32 %v586, 0.0
      %v651 = vmax.f32 %v591, 0.0
      %v652 = vmax.f32 %v594, 0.0
      %v653 = vmax.f32 %v599, 0.0
      %v654 = vmax.f32 %v602, 0.0
      %v655 = vmax.f32 %v607, 0.0
      %v656 = vmax.f32 %v610, 0.0
      %v657 = vmax.f32 %v615, 0.0
      %v658 = vmax.f32 %v618, 0.0
      %v659 = vmax.f32 %v623, 0.0
      %v660 = vmax.f32 %v626, 0.0
      %661 = vst [vmem:[%s257] sm:$0xff] %v629
      %662 = vst [vmem:[%s257 + $0x8] sm:$0xff] %v630
      %663 = vst [vmem:[%s257 + $0x10] sm:$0xff] %v631
      %664 = vst [vmem:[%s257 + $0x18] sm:$0xff] %v632
      %665 = vst [vmem:[%s257 + $0x20] sm:$0xff] %v633
      %666 = vst [vmem:[%s257 + $0x28] sm:$0xff] %v634
      %667 = vst [vmem:[%s257 + $0x30] sm:$0xff] %v635
      %668 = vst [vmem:[%s257 + $0x38] sm:$0xff] %v636
      %669 = vst [vmem:[%s257 + $0x40] sm:$0xff] %v637
      %670 = vst [vmem:[%s257 + $0x48] sm:$0xff] %v638
      %671 = vst [vmem:[%s257 + $0x50] sm:$0xff] %v639
      %672 = vst [vmem:[%s257 + $0x58] sm:$0xff] %v640
      %673 = vst [vmem:[%s257 + $0x60] sm:$0xff] %v641
      %674 = vst [vmem:[%s257 + $0x68] sm:$0xff] %v642
      %675 = vst [vmem:[%s257 + $0x70] sm:$0xff] %v643
      %676 = vst [vmem:[%s257 + $0x78] sm:$0xff] %v644
      %677 = vst [vmem:[%s257 + $0x80] sm:$0xff] %v645
      %678 = vst [vmem:[%s257 + $0x88] sm:$0xff] %v646
      %679 = vst [vmem:[%s257 + $0x90] sm:$0xff] %v647
      %680 = vst [vmem:[%s257 + $0x98] sm:$0xff] %v648
      %681 = vst [vmem:[%s257 + $0xa0] sm:$0xff] %v649
      %682 = vst [vmem:[%s257 + $0xa8] sm:$0xff] %v650
      %683 = vst [vmem:[%s257 + $0xb0] sm:$0xff] %v651
      %684 = vst [vmem:[%s257 + $0xb8] sm:$0xff] %v652
      %685 = vst [vmem:[%s257 + $0xc0] sm:$0xff] %v653
      %686 = vst [vmem:[%s257 + $0xc8] sm:$0xff] %v654
      %687 = vst [vmem:[%s257 + $0xd0] sm:$0xff] %v655
      %688 = vst [vmem:[%s257 + $0xd8] sm:$0xff] %v656
      %689 = vst [vmem:[%s257 + $0xe0] sm:$0xff] %v657
      %690 = vst [vmem:[%s257 + $0xe8] sm:$0xff] %v658
      %691 = vst [vmem:[%s257 + $0xf0] sm:$0xff] %v659
      %692 = vst [vmem:[%s257 + $0xf8] sm:$0xff] %v660
      %s693 = smul.u32 32, %s19
      %p694 = scmp.lt.s32.totalorder %s693, 63
      %s695 = scalar_select %p694, %s693, 63
      %p696 = scmp.lt.s32.totalorder %s20, 0
      %s697 = scalar_select %p696, %s20, 0
      %s698 = sadd.s32 %s697, %s695
      %s699 = smul.addr %s698, 8
      %s700 = scalar_lea.vmem %s3, %s699
      // Predicated region
      $region33: #{_basic_conv2d_forward.1} parent=31 // pred_check
        %p701 = pneg %p135
      $region34: #{_basic_conv2d_forward.1} parent=31 // pred_check_branch
        %703 = sbr.rel (%p701) target = $region36
      $region35: #{_basic_conv2d_forward.1} parent=31 // pred_region
        %s704 = smul.u32 32, %s19
      $region36: #{_basic_conv2d_forward.1} parent=31 // pred_fallthru
        _
    $region32: #{_basic_conv2d_forward.1} parent=5 // pred_fallthru
      _
    %p705 = scmp.le.s32.totalorder 2, %s9
    // Predicated region
    $region37: #{_basic_conv2d_forward.1} parent=5 // pred_check
      %p706 = pneg %p705
    $region38: #{_basic_conv2d_forward.1} parent=5 // pred_check_branch
      %708 = sbr.rel (%p706) target = $region40
    $region39: #{_basic_conv2d_forward.1} parent=5 // pred_region
      %s709 = ssub.s32 %s9, 2
      // Predicated region
      $region41: #{_basic_conv2d_forward.1} parent=39 // pred_check
        %p710 = pneg %p141
      $region42: #{_basic_conv2d_forward.1} parent=39 // pred_check_branch
        %712 = sbr.rel (%p710) target = $region44
      $region43: #{_basic_conv2d_forward.1} parent=39 // pred_region
        %s713 = smul.u32 32, %s22
        %p714 = scmp.lt.s32.totalorder %s713, 63
        %s715 = scalar_select %p714, %s713, 63
        %p716 = scmp.lt.s32.totalorder %s23, 0
        %s717 = scalar_select %p716, %s23, 0
        %s718 = sadd.s32 %s717, %s715
        %s719 = smul.addr %s718, 8
        %s720 = scalar_lea.vmem %s3, %s719
      $region44: #{_basic_conv2d_forward.1} parent=39 // pred_fallthru
        _
    $region40: #{_basic_conv2d_forward.1} parent=5 // pred_fallthru
      _
  $region6: #{_basic_conv2d_forward.1} parent=0 // loop_footer
    %s13 = sadd.s32 1, %s9
  $region7: #{_basic_conv2d_forward.1} parent=0 // loop_footer_branch
    %8 = sbr.rel target = $region3
  $region8: #{_basic_conv2d_forward.1} parent=0 // loop_exit
    _

</llo_original>
